<compile_context>
chip_gen: v7x
topology: tpu7x:2x2x1
jax: 0.10.0
libtpu: 0.0.40
codegen_flags: <defaults>
</compile_context>

<pallas_src>
import jax
import jax.numpy as jnp
from jax import lax
from jax.experimental import pallas as pl
from jax.experimental.pallas import tpu as pltpu

_LANE_CHUNK = 256  # inner lane sub-chunk: h = [128, 256] f32 = 32 vregs (no spill)


def policy_net_kernel(x_ref, w1_ref, b1_ref, w2d_ref, b2d_ref, out_ref):
    # x_ref  : [S, TB]    w1_ref : [H, S]   b1_ref : [H, 1]
    # w2d_ref: [1, H]     b2d_ref: [1, 1]   out_ref: [2, TB]
    _, TB = x_ref.shape
    chunk = min(_LANE_CHUNK, TB)
    n_chunks = TB // chunk

    # Hoist the (VMEM-resident) weight loads out of the inner loop.
    w1 = w1_ref[...]            # [H, S]
    b1 = b1_ref[...]            # [H, 1]  (broadcast over lanes)
    w2d = w2d_ref[...]          # [1, H]
    b2d = b2d_ref[...]          # [1, 1]

    def body(c, carry):
        start = pl.multiple_of(c * chunk, chunk)
        x_c = x_ref[:, pl.ds(start, chunk)]                               # [S, chunk]
        h = jnp.dot(w1, x_c, preferred_element_type=jnp.float32)          # [H, chunk]
        h = jnp.maximum(h + b1, 0.0)
        # difference logit d = l0 - l1, directly lane-dense, no sublane slicing
        d = jnp.dot(w2d, h, preferred_element_type=jnp.float32) + b2d     # [1, chunk]
        # 2-class softmax: p1 = 1/(1+exp(d)), p0 = 1 - p1 (exact; approx recip
        # would break the atol=1e-5 check, so keep the precise divide).
        p1 = 1.0 / (1.0 + jnp.exp(d))
        p0 = 1.0 - p1
        # single full [2, chunk] lane-dense store (no masked per-row vst)
        out_ref[:, pl.ds(start, chunk)] = jnp.concatenate(
            [p0, p1], axis=0).astype(out_ref.dtype)
        return carry

    lax.fori_loop(0, n_chunks, body, 0, unroll=(n_chunks <= 8))


def _round_up(v, m):
    return ((v + m - 1) // m) * m


def policy_net_forward_t(xT, w1, b1, w2, b2, *, batch_tile=4096):
    """Transpose-free fast path.

    xT: [state_dim, B]; w1: [state_dim, hidden]; b1: [hidden];
    w2: [hidden, 2]; b2: [2]  ->  probs [2, B]  (row a = P(action a))."""
    S, B = xT.shape
    H = w1.shape[1]
    A = w2.shape[1]
    assert A == 2, "kernel is specialized for CartPole's action_dim == 2"
    assert w1.shape[0] == S

    # Weight plumbing (tiny, done once per call / jit-constant-folded).
    w1T = w1.T                                        # [H, S]
    b1c = jnp.reshape(b1, (H, 1))                     # [H, 1]
    b2f = jnp.reshape(b2, (A,))
    w2d = jnp.reshape(w2[:, 0] - w2[:, 1], (1, H))    # [1, H]  diff-logit weights
    b2d = jnp.reshape(b2f[0] - b2f[1], (1, 1))        # [1, 1]  diff-logit bias

    # Batch tile: big (amortize per-step overhead) but keep >= 2 grid steps for
    # moderate B (v7x megacore), and keep it a multiple of the inner lane chunk.
    batch_tile = max(_round_up(batch_tile, _LANE_CHUNK), _LANE_CHUNK)
    if B <= 2 * 128:
        TB = 128
    else:
        TB = min(batch_tile, _round_up(pl.cdiv(B, 2), _LANE_CHUNK))
    B_pad = _round_up(B, TB)
    if B_pad != B:
        xT = jnp.pad(xT, ((0, 0), (0, B_pad - B)))    # zero-pad -> valid, discarded

    grid = (B_pad // TB,)

    cost = pl.CostEstimate(
        flops=2 * B_pad * H * (S + 1),
        transcendentals=B_pad,
        bytes_accessed=4 * (B_pad * (S + A) + H * (S + 2) + 1),
    )

    probs_t = pl.pallas_call(
        policy_net_kernel,
        out_shape=jax.ShapeDtypeStruct((A, B_pad), jnp.float32),
        grid=grid,
        in_specs=[
            pl.BlockSpec((S, TB), lambda i: (0, i)),   # x tile: only batch moves
            pl.BlockSpec((H, S), lambda i: (0, 0)),    # w1 : resident
            pl.BlockSpec((H, 1), lambda i: (0, 0)),    # b1 : resident
            pl.BlockSpec((1, H), lambda i: (0, 0)),    # w2d: resident
            pl.BlockSpec((1, 1), lambda i: (0, 0)),    # b2d: resident
        ],
        out_specs=pl.BlockSpec((A, TB), lambda i: (0, i)),
        compiler_params=pltpu.CompilerParams(
            dimension_semantics=("parallel",),         # megacore-shardable batch axis
        ),
        cost_estimate=cost,
    )(xT, w1T, b1c, w2d, b2d)

    return probs_t[:, :B]                              # [2, B]


def policy_net_forward(x, w1, b1, w2, b2, *, batch_tile=4096):
    """PyTorch-layout compatibility wrapper: x [B, S] -> probs [B, A].
    Pays two extra HBM transpose passes; prefer policy_net_forward_t."""
    return policy_net_forward_t(x.T, w1, b1, w2, b2, batch_tile=batch_tile).T


def init_params(key, state_dim, hidden_dim, action_dim):
    """torch.nn.Linear default init: U(-1/sqrt(fan_in), 1/sqrt(fan_in))."""
    k1, k2, k3, k4 = jax.random.split(key, 4)
    bound1 = 1.0 / jnp.sqrt(jnp.float32(state_dim))
    bound2 = 1.0 / jnp.sqrt(jnp.float32(hidden_dim))
    w1 = jax.random.uniform(k1, (state_dim, hidden_dim), jnp.float32, -bound1, bound1)
    b1 = jax.random.uniform(k2, (hidden_dim,), jnp.float32, -bound1, bound1)
    w2 = jax.random.uniform(k3, (hidden_dim, action_dim), jnp.float32, -bound2, bound2)
    b2 = jax.random.uniform(k4, (action_dim,), jnp.float32, -bound2, bound2)
    return w1, b1, w2, b2


if __name__ == "__main__":
    # CartPole-v1: state_dim=4, action_dim=2, hidden_dim=128
    state_dim, hidden_dim, action_dim = 4, 128, 2
    batch = 2

    key = jax.random.PRNGKey(0)
    kx, kp, kb = jax.random.split(key, 3)
    x = jax.random.normal(kx, (batch, state_dim), jnp.float32)
    w1, b1, w2, b2 = init_params(kp, state_dim, hidden_dim, action_dim)

    # 1) PyTorch-layout compat path, tiny batch
    probs = jax.block_until_ready(policy_net_forward(x, w1, b1, w2, b2))
    h_ref = jnp.maximum(x @ w1 + b1[None, :], 0.0)
    probs_ref = jax.nn.softmax(h_ref @ w2 + b2[None, :], axis=1)
    assert probs.shape == (batch, action_dim)
    assert jnp.allclose(probs, probs_ref, atol=1e-5), "mismatch vs reference"
    assert jnp.allclose(jnp.sum(probs, axis=1), 1.0, atol=1e-5)

    # 2) Larger, multi-tile, non-tile-aligned batch through the transpose-free path
    Bb = 1000
    xbT = jax.random.normal(kb, (state_dim, Bb), jnp.float32)   # already [S, B]
    probs_t = jax.block_until_ready(policy_net_forward_t(xbT, w1, b1, w2, b2))
    hb = jnp.maximum(xbT.T @ w1 + b1[None, :], 0.0)
    probs_b_ref = jax.nn.softmax(hb @ w2 + b2[None, :], axis=1)
    assert probs_t.shape == (action_dim, Bb)
    assert jnp.allclose(probs_t.T, probs_b_ref, atol=1e-5), "mismatch vs reference (batched)"
    assert jnp.allclose(jnp.sum(probs_t, axis=0), 1.0, atol=1e-5)

    print("KERNEL_OK")
</pallas_src>

<mosaic_0001>
module attributes {stable_mosaic.version = 11 : i64} {
  func.func @policy_net_kernel(%arg0: i32, %arg1: memref<4x128xf32, #tpu.memory_space<vmem>>, %arg2: memref<128x4xf32, #tpu.memory_space<vmem>>, %arg3: memref<128x1xf32, #tpu.memory_space<vmem>>, %arg4: memref<1x128xf32, #tpu.memory_space<vmem>>, %arg5: memref<1x1xf32, #tpu.memory_space<vmem>>, %arg6: memref<2x128xf32, #tpu.memory_space<vmem>>) attributes {dimension_semantics = [#tpu.dimension_semantics<parallel>], iteration_bounds = array<i64: 1>, scalar_prefetch = 0 : i64, scratch_operands = 0 : i64, tpu.core_type = #tpu.core_type<tc>, window_params = [{transform_indices = @transform_0, window_bounds = array<i64: 4, 128>}, {pipeline_mode = #tpu.pipeline_mode<synchronous>, transform_indices = @transform_1, window_bounds = array<i64: 128, 4>}, {pipeline_mode = #tpu.pipeline_mode<synchronous>, transform_indices = @transform_2, window_bounds = array<i64: 128, 1>}, {pipeline_mode = #tpu.pipeline_mode<synchronous>, transform_indices = @transform_3, window_bounds = array<i64: 1, 128>}, {pipeline_mode = #tpu.pipeline_mode<synchronous>, transform_indices = @transform_4, window_bounds = array<i64: 1, 1>}, {transform_indices = @transform_5, window_bounds = array<i64: 2, 128>}]} {
    %c0 = arith.constant 0 : index
    %c0_0 = arith.constant 0 : index
    %0 = vector.load %arg2[%c0, %c0_0] : memref<128x4xf32, #tpu.memory_space<vmem>>, vector<128x4xf32>
    %c0_1 = arith.constant 0 : index
    %c0_2 = arith.constant 0 : index
    %1 = vector.load %arg3[%c0_1, %c0_2] : memref<128x1xf32, #tpu.memory_space<vmem>>, vector<128x1xf32>
    %c0_3 = arith.constant 0 : index
    %c0_4 = arith.constant 0 : index
    %2 = vector.load %arg4[%c0_3, %c0_4] : memref<1x128xf32, #tpu.memory_space<vmem>>, vector<1x128xf32>
    %c0_5 = arith.constant 0 : index
    %c0_6 = arith.constant 0 : index
    %3 = vector.load %arg5[%c0_5, %c0_6] : memref<1x1xf32, #tpu.memory_space<vmem>>, vector<1x1xf32>
    %c0_i32 = arith.constant 0 : i32
    %c128_i32 = arith.constant 128 : i32
    %4 = arith.muli %c0_i32, %c128_i32 : i32
    %5 = tpu.assume_multiple %4, 128 : i32
    %c0_7 = arith.constant 0 : index
    %6 = arith.index_cast %5 : i32 to index
    %7 = vector.load %arg1[%c0_7, %6] : memref<4x128xf32, #tpu.memory_space<vmem>>, vector<4x128xf32>
    %cst = arith.constant dense<0.000000e+00> : vector<128x128xf32>
    %8 = tpu.matmul %0, %7, %cst {dimension_numbers = #tpu.dot_dimension_numbers<[1], [0], [0], [1], [0, 0, 1, 1], [], []>} : vector<128x4xf32>, vector<4x128xf32>, vector<128x128xf32> -> vector<128x128xf32>
    %9 = vector.broadcast %1 : vector<128x1xf32> to vector<128x128xf32>
    %10 = arith.addf %8, %9 : vector<128x128xf32>
    %cst_8 = arith.constant 0.000000e+00 : f32
    %11 = vector.broadcast %cst_8 : f32 to vector<128x128xf32>
    %12 = arith.maximumf %10, %11 : vector<128x128xf32>
    %cst_9 = arith.constant dense<0.000000e+00> : vector<1x128xf32>
    %13 = tpu.matmul %2, %12, %cst_9 {dimension_numbers = #tpu.dot_dimension_numbers<[1], [0], [0], [1], [0, 0, 1, 1], [], []>} : vector<1x128xf32>, vector<128x128xf32>, vector<1x128xf32> -> vector<1x128xf32>
    %14 = vector.broadcast %3 : vector<1x1xf32> to vector<1x128xf32>
    %15 = arith.addf %13, %14 : vector<1x128xf32>
    %16 = math.exp %15 : vector<1x128xf32>
    %cst_10 = arith.constant 1.000000e+00 : f32
    %17 = vector.broadcast %cst_10 : f32 to vector<1x128xf32>
    %18 = arith.addf %17, %16 : vector<1x128xf32>
    %cst_11 = arith.constant 1.000000e+00 : f32
    %19 = vector.broadcast %cst_11 : f32 to vector<1x128xf32>
    %20 = arith.divf %19, %18 : vector<1x128xf32>
    %cst_12 = arith.constant 1.000000e+00 : f32
    %21 = vector.broadcast %cst_12 : f32 to vector<1x128xf32>
    %22 = arith.subf %21, %20 : vector<1x128xf32>
    %23 = tpu.concatenate %22, %20 in 0 : vector<1x128xf32>, vector<1x128xf32> -> vector<2x128xf32>
    %c0_13 = arith.constant 0 : index
    %24 = arith.index_cast %5 : i32 to index
    %25 = vector.load %arg6[%c0_13, %24] : memref<2x128xf32, #tpu.memory_space<vmem>>, vector<2x128xf32>
    tpu.vector_store %arg6[%c0_13, %24], %23 {strides = array<i32>} : memref<2x128xf32, #tpu.memory_space<vmem>>, vector<2x128xf32>,
    %c1_i32 = arith.constant 1 : i32
    return
  }
  func.func @transform_0(%arg0: i32) -> (i32, i32) {
    %c0_i32 = arith.constant 0 : i32
    %c0_i32_0 = arith.constant 0 : i32
    return %c0_i32, %arg0 : i32, i32
  }
  func.func @transform_1(%arg0: i32) -> (i32, i32) {
    %c0_i32 = arith.constant 0 : i32
    %c0_i32_0 = arith.constant 0 : i32
    %c0_i32_1 = arith.constant 0 : i32
    return %c0_i32, %c0_i32_0 : i32, i32
  }
  func.func @transform_2(%arg0: i32) -> (i32, i32) {
    %c0_i32 = arith.constant 0 : i32
    %c0_i32_0 = arith.constant 0 : i32
    %c0_i32_1 = arith.constant 0 : i32
    return %c0_i32, %c0_i32_0 : i32, i32
  }
  func.func @transform_3(%arg0: i32) -> (i32, i32) {
    %c0_i32 = arith.constant 0 : i32
    %c0_i32_0 = arith.constant 0 : i32
    %c0_i32_1 = arith.constant 0 : i32
    return %c0_i32, %c0_i32_0 : i32, i32
  }
  func.func @transform_4(%arg0: i32) -> (i32, i32) {
    %c0_i32 = arith.constant 0 : i32
    %c0_i32_0 = arith.constant 0 : i32
    %c0_i32_1 = arith.constant 0 : i32
    return %c0_i32, %c0_i32_0 : i32, i32
  }
  func.func @transform_5(%arg0: i32) -> (i32, i32) {
    %c0_i32 = arith.constant 0 : i32
    %c0_i32_0 = arith.constant 0 : i32
    return %c0_i32, %arg0 : i32, i32
  }
}

</mosaic_0001>

<llo_original>
// kernel: tpu_custom_call.1
$region0: #{tpu_custom_call.1}
  #allocation0 [shape = 'u32[]', space=smem, size = 0x4, offset = 0x4, fixed_abs, tag = 'smem constant byte address 0x4 - core index']
  #allocation1 [shape = 'u32[144,128]{1,0:T(1,128)}', space=vmem, size = 0x12000, scoped, tag = 'internal scratch']
  #allocation2 [shape = 'f32[1,1]{1,0:T(1,128)S(1)}', space=vmem, size = 0x200, scoped, tag = 'scoped memory for tpu_custom_call.1']
  %s0 = inlined_call_operand.vmem [shape: f32[4,128], index: 0, kind: input, shape index: {}]
  %s1 = inlined_call_operand.vmem [shape: f32[128,4], index: 1, kind: input, shape index: {}]
  %s2 = inlined_call_operand.vmem [shape: f32[128,1], index: 2, kind: input, shape index: {}]
  %s3 = inlined_call_operand.vmem [shape: f32[1,128], index: 3, kind: input, shape index: {}]
  %s4 = inlined_call_operand.<no memory space> [shape: f32[1,1], index: 4, kind: input, shape index: {}]
  %s5 = inlined_call_operand.hbm [shape: f32[2,128], index: 5, kind: output, shape index: {}]
  %s6 = sld [smem:[#allocation0]]
  $region30: #{tpu_custom_call.1} parent=0
    _
  %s8 = ssub.s32 1, %s6
  %s9 = scalar_select 0, %s8, %s6
  %v10 = vstv %s4
  %11 = vst [vmem:[#allocation2] sm:$0x1] %v10
  $region1: #{tpu_custom_call.1} parent=0
    #allocation3 [shape = 'u8[1024]{0}', space=vmem, size = 0x400, scoped, tag = 'output window, operand 0, single buffered']
    #allocation4 [shape = 's32[1]{0}', space=sflag, size = 0x4, scoped, tag = 'scoped memory for tpu_custom_call.1']
    %12 = vsyncpa [#allocation4], 0
    // Predicated region
    $region2: #{tpu_custom_call.1} parent=1 // pred_check
      _
    $region3: #{tpu_custom_call.1} parent=1 // pred_check_branch
      %14 = sbr.rel (0) target = $region5
    $region4: #{tpu_custom_call.1} parent=1 // pred_region
      _
    $region5: #{tpu_custom_call.1} parent=1 // pred_fallthru
      _
    // Predicated region
    $region6: #{tpu_custom_call.1} parent=1 // pred_check
      _
    $region7: #{tpu_custom_call.1} parent=1 // pred_check_branch
      %16 = sbr.rel (0) target = $region9
    $region8: #{tpu_custom_call.1} parent=1 // pred_region
      _
    $region9: #{tpu_custom_call.1} parent=1 // pred_fallthru
      _
    // Predicated region
    $region10: #{tpu_custom_call.1} parent=1 // pred_check
      _
    $region11: #{tpu_custom_call.1} parent=1 // pred_check_branch
      %18 = sbr.rel (0) target = $region13
    $region12: #{tpu_custom_call.1} parent=1 // pred_region
      _
    $region13: #{tpu_custom_call.1} parent=1 // pred_fallthru
      _
    // Predicated region
    $region14: #{tpu_custom_call.1} parent=1 // pred_check
      _
    $region15: #{tpu_custom_call.1} parent=1 // pred_check_branch
      %20 = sbr.rel (0) target = $region17
    $region16: #{tpu_custom_call.1} parent=1 // pred_region
      _
    $region17: #{tpu_custom_call.1} parent=1 // pred_fallthru
      _
    // Predicated region
    $region18: #{tpu_custom_call.1} parent=1 // pred_check
      _
    $region19: #{tpu_custom_call.1} parent=1 // pred_check_branch
      %22 = sbr.rel (0) target = $region21
    $region20: #{tpu_custom_call.1} parent=1 // pred_region
      _
    $region21: #{tpu_custom_call.1} parent=1 // pred_fallthru
      _
    %v23 = vld [vmem:[%s1] sm:$0xff]
    %v24 = vld [vmem:[%s1 + $0x8] sm:$0xff]
    %v25 = vld [vmem:[%s1 + $0x10] sm:$0xff]
    %v26 = vld [vmem:[%s1 + $0x18] sm:$0xff]
    %v27 = vld [vmem:[%s1 + $0x20] sm:$0xff]
    %v28 = vld [vmem:[%s1 + $0x28] sm:$0xff]
    %v29 = vld [vmem:[%s1 + $0x30] sm:$0xff]
    %v30 = vld [vmem:[%s1 + $0x38] sm:$0xff]
    %v31 = vld [vmem:[%s1 + $0x40] sm:$0xff]
    %v32 = vld [vmem:[%s1 + $0x48] sm:$0xff]
    %v33 = vld [vmem:[%s1 + $0x50] sm:$0xff]
    %v34 = vld [vmem:[%s1 + $0x58] sm:$0xff]
    %v35 = vld [vmem:[%s1 + $0x60] sm:$0xff]
    %v36 = vld [vmem:[%s1 + $0x68] sm:$0xff]
    %v37 = vld [vmem:[%s1 + $0x70] sm:$0xff]
    %v38 = vld [vmem:[%s1 + $0x78] sm:$0xff]
    %v39 = vld [vmem:[%s2] sm:$0xff]
    %v40 = vld [vmem:[%s2 + $0x8] sm:$0xff]
    %v41 = vld [vmem:[%s2 + $0x10] sm:$0xff]
    %v42 = vld [vmem:[%s2 + $0x18] sm:$0xff]
    %v43 = vld [vmem:[%s2 + $0x20] sm:$0xff]
    %v44 = vld [vmem:[%s2 + $0x28] sm:$0xff]
    %v45 = vld [vmem:[%s2 + $0x30] sm:$0xff]
    %v46 = vld [vmem:[%s2 + $0x38] sm:$0xff]
    %v47 = vld [vmem:[%s2 + $0x40] sm:$0xff]
    %v48 = vld [vmem:[%s2 + $0x48] sm:$0xff]
    %v49 = vld [vmem:[%s2 + $0x50] sm:$0xff]
    %v50 = vld [vmem:[%s2 + $0x58] sm:$0xff]
    %v51 = vld [vmem:[%s2 + $0x60] sm:$0xff]
    %v52 = vld [vmem:[%s2 + $0x68] sm:$0xff]
    %v53 = vld [vmem:[%s2 + $0x70] sm:$0xff]
    %v54 = vld [vmem:[%s2 + $0x78] sm:$0xff]
    %v55 = vld [vmem:[%s3] sm:$0x1]
    %v56 = vld [vmem:[#allocation2] sm:$0x1]
    %v57 = vld [vmem:[%s0] sm:$0xf]
    %59 = vset.pattern.permute.xlu0 0
    %60 = vperm.xlu0 %59, %v39
    %v61 = vpop.permute.xlu0 %60
    %64 = vset.pattern.permute.xlu0 0
    %65 = vperm.xlu0 %64, %v40
    %v66 = vpop.permute.xlu0 %65
    %69 = vset.pattern.permute.xlu0 0
    %70 = vperm.xlu0 %69, %v41
    %v71 = vpop.permute.xlu0 %70
    %74 = vset.pattern.permute.xlu0 0
    %75 = vperm.xlu0 %74, %v42
    %v76 = vpop.permute.xlu0 %75
    %79 = vset.pattern.permute.xlu0 0
    %80 = vperm.xlu0 %79, %v43
    %v81 = vpop.permute.xlu0 %80
    %84 = vset.pattern.permute.xlu0 0
    %85 = vperm.xlu0 %84, %v44
    %v86 = vpop.permute.xlu0 %85
    %89 = vset.pattern.permute.xlu0 0
    %90 = vperm.xlu0 %89, %v45
    %v91 = vpop.permute.xlu0 %90
    %94 = vset.pattern.permute.xlu0 0
    %95 = vperm.xlu0 %94, %v46
    %v96 = vpop.permute.xlu0 %95
    %99 = vset.pattern.permute.xlu0 0
    %100 = vperm.xlu0 %99, %v47
    %v101 = vpop.permute.xlu0 %100
    %104 = vset.pattern.permute.xlu0 0
    %105 = vperm.xlu0 %104, %v48
    %v106 = vpop.permute.xlu0 %105
    %109 = vset.pattern.permute.xlu0 0
    %110 = vperm.xlu0 %109, %v49
    %v111 = vpop.permute.xlu0 %110
    %114 = vset.pattern.permute.xlu0 0
    %115 = vperm.xlu0 %114, %v50
    %v116 = vpop.permute.xlu0 %115
    %119 = vset.pattern.permute.xlu0 0
    %120 = vperm.xlu0 %119, %v51
    %v121 = vpop.permute.xlu0 %120
    %124 = vset.pattern.permute.xlu0 0
    %125 = vperm.xlu0 %124, %v52
    %v126 = vpop.permute.xlu0 %125
    %129 = vset.pattern.permute.xlu0 0
    %130 = vperm.xlu0 %129, %v53
    %v131 = vpop.permute.xlu0 %130
    %134 = vset.pattern.permute.xlu0 0
    %135 = vperm.xlu0 %134, %v54
    %v136 = vpop.permute.xlu0 %135
    %vm138 = vcmask 31744
    %v140 = vsel %vm138, %v23, 0
    %v143 = vsel %vm138, %v24, 0
    %v146 = vsel %vm138, %v25, 0
    %v149 = vsel %vm138, %v26, 0
    %v152 = vsel %vm138, %v27, 0
    %v155 = vsel %vm138, %v28, 0
    %v158 = vsel %vm138, %v29, 0
    %v161 = vsel %vm138, %v30, 0
    %v164 = vsel %vm138, %v31, 0
    %v167 = vsel %vm138, %v32, 0
    %v170 = vsel %vm138, %v33, 0
    %v173 = vsel %vm138, %v34, 0
    %v176 = vsel %vm138, %v35, 0
    %v179 = vsel %vm138, %v36, 0
    %v182 = vsel %vm138, %v37, 0
    %v185 = vsel %vm138, %v38, 0
    %vm187 = vcmask 1043456
    %v189 = vsel %vm187, %v57, 0
    %191 = vmatprep.subr.mxu0 0.0
    %192 = vmatpush1.msra.mxu0 %v189
    %193 = vmatprep.subr.mxu0 0.0
    %194 = vmatpush1.msra.mxu0 0.0
    %195 = vmatprep.subr.mxu0 0.0
    %196 = vmatpush1.msra.mxu0 0.0
    %197 = vmatprep.subr.mxu0 0.0
    %198 = vmatpush1.msra.mxu0 0.0
    %199 = vmatprep.subr.mxu0 0.0
    %200 = vmatpush1.msra.mxu0 0.0
    %201 = vmatprep.subr.mxu0 0.0
    %202 = vmatpush1.msra.mxu0 0.0
    %203 = vmatprep.subr.mxu0 0.0
    %204 = vmatpush1.msra.mxu0 0.0
    %205 = vmatprep.subr.mxu0 0.0
    %206 = vmatpush1.msra.mxu0 0.0
    %207 = vmatprep.subr.mxu0 0.0
    %208 = vmatpush1.msra.mxu0 0.0
    %209 = vmatprep.subr.mxu0 0.0
    %210 = vmatpush1.msra.mxu0 0.0
    %211 = vmatprep.subr.mxu0 0.0
    %212 = vmatpush1.msra.mxu0 0.0
    %213 = vmatprep.subr.mxu0 0.0
    %214 = vmatpush1.msra.mxu0 0.0
    %215 = vmatprep.subr.mxu0 0.0
    %216 = vmatpush1.msra.mxu0 0.0
    %217 = vmatprep.subr.mxu0 0.0
    %218 = vmatpush1.msra.mxu0 0.0
    %219 = vmatprep.subr.mxu0 0.0
    %220 = vmatpush1.msra.mxu0 0.0
    %221 = vmatprep.subr.mxu0 0.0
    %222 = vmatpush1.msra.mxu0 0.0
    %223 = vmatprep.subr.mxu0 0.0
    %224 = vmatpush1.msra.mxu0 0.0
    %225 = vmatprep.subr.mxu0 0.0
    %226 = vmatpush1.msra.mxu0 0.0
    %227 = vmatprep.subr.mxu0 0.0
    %228 = vmatpush1.msra.mxu0 0.0
    %229 = vmatprep.subr.mxu0 0.0
    %230 = vmatpush1.msra.mxu0 0.0
    %231 = vmatprep.subr.mxu0 0.0
    %232 = vmatpush1.msra.mxu0 0.0
    %233 = vmatprep.subr.mxu0 0.0
    %234 = vmatpush1.msra.mxu0 0.0
    %235 = vmatprep.subr.mxu0 0.0
    %236 = vmatpush1.msra.mxu0 0.0
    %237 = vmatprep.subr.mxu0 0.0
    %238 = vmatpush1.msra.mxu0 0.0
    %239 = vmatprep.subr.mxu0 0.0
    %240 = vmatpush1.msra.mxu0 0.0
    %241 = vmatprep.subr.mxu0 0.0
    %242 = vmatpush1.msra.mxu0 0.0
    %243 = vmatprep.subr.mxu0 0.0
    %244 = vmatpush1.msra.mxu0 0.0
    %245 = vmatprep.subr.mxu0 0.0
    %246 = vmatpush1.msra.mxu0 0.0
    %247 = vmatprep.subr.mxu0 0.0
    %248 = vmatpush1.msra.mxu0 0.0
    %249 = vmatprep.subr.mxu0 0.0
    %250 = vmatpush1.msra.mxu0 0.0
    %251 = vmatprep.subr.mxu0 0.0
    %252 = vmatpush1.msra.mxu0 0.0
    %253 = vmatprep.subr.mxu0 0.0
    %254 = vmatpush1.msra.mxu0 0.0
    %255 = vmatprep.mubr.f32.mxu0 0.0
    %256 = vmatmul.mubr.f32.gmra.mrb[0].mxu0 %v140
    %v257 = vpop.f32.mrb[0].mxu0
    %v258 = vadd.f32 %v61, %v257
    %v259 = vpop.f32.mrb[0].mxu0
    %260 = vmatprep.mubr.f32.mxu0 0.0
    %261 = vmatmul.mubr.f32.gmra.mrb[0].mxu0 %v143
    %v262 = vpop.f32.mrb[0].mxu0
    %v263 = vadd.f32 %v66, %v262
    %v264 = vpop.f32.mrb[0].mxu0
    %265 = vmatprep.mubr.f32.mxu0 0.0
    %266 = vmatmul.mubr.f32.gmra.mrb[0].mxu0 %v146
    %v267 = vpop.f32.mrb[0].mxu0
    %v268 = vadd.f32 %v71, %v267
    %v269 = vpop.f32.mrb[0].mxu0
    %270 = vmatprep.mubr.f32.mxu0 0.0
    %271 = vmatmul.mubr.f32.gmra.mrb[0].mxu0 %v149
    %v272 = vpop.f32.mrb[0].mxu0
    %v273 = vadd.f32 %v76, %v272
    %v274 = vpop.f32.mrb[0].mxu0
    %275 = vmatprep.mubr.f32.mxu0 0.0
    %276 = vmatmul.mubr.f32.gmra.mrb[0].mxu0 %v152
    %v277 = vpop.f32.mrb[0].mxu0
    %v278 = vadd.f32 %v81, %v277
    %v279 = vpop.f32.mrb[0].mxu0
    %280 = vmatprep.mubr.f32.mxu0 0.0
    %281 = vmatmul.mubr.f32.gmra.mrb[0].mxu0 %v155
    %v282 = vpop.f32.mrb[0].mxu0
    %v283 = vadd.f32 %v86, %v282
    %v284 = vpop.f32.mrb[0].mxu0
    %285 = vmatprep.mubr.f32.mxu0 0.0
    %286 = vmatmul.mubr.f32.gmra.mrb[0].mxu0 %v158
    %v287 = vpop.f32.mrb[0].mxu0
    %v288 = vadd.f32 %v91, %v287
    %v289 = vpop.f32.mrb[0].mxu0
    %290 = vmatprep.mubr.f32.mxu0 0.0
    %291 = vmatmul.mubr.f32.gmra.mrb[0].mxu0 %v161
    %v292 = vpop.f32.mrb[0].mxu0
    %v293 = vadd.f32 %v96, %v292
    %v294 = vpop.f32.mrb[0].mxu0
    %295 = vmatprep.mubr.f32.mxu0 0.0
    %296 = vmatmul.mubr.f32.gmra.mrb[0].mxu0 %v164
    %v297 = vpop.f32.mrb[0].mxu0
    %v298 = vadd.f32 %v101, %v297
    %v299 = vpop.f32.mrb[0].mxu0
    %300 = vmatprep.mubr.f32.mxu0 0.0
    %301 = vmatmul.mubr.f32.gmra.mrb[0].mxu0 %v167
    %v302 = vpop.f32.mrb[0].mxu0
    %v303 = vadd.f32 %v106, %v302
    %v304 = vpop.f32.mrb[0].mxu0
    %305 = vmatprep.mubr.f32.mxu0 0.0
    %306 = vmatmul.mubr.f32.gmra.mrb[0].mxu0 %v170
    %v307 = vpop.f32.mrb[0].mxu0
    %v308 = vadd.f32 %v111, %v307
    %v309 = vpop.f32.mrb[0].mxu0
    %310 = vmatprep.mubr.f32.mxu0 0.0
    %311 = vmatmul.mubr.f32.gmra.mrb[0].mxu0 %v173
    %v312 = vpop.f32.mrb[0].mxu0
    %v313 = vadd.f32 %v116, %v312
    %v314 = vpop.f32.mrb[0].mxu0
    %315 = vmatprep.mubr.f32.mxu0 0.0
    %316 = vmatmul.mubr.f32.gmra.mrb[0].mxu0 %v176
    %v317 = vpop.f32.mrb[0].mxu0
    %v318 = vadd.f32 %v121, %v317
    %v319 = vpop.f32.mrb[0].mxu0
    %320 = vmatprep.mubr.f32.mxu0 0.0
    %321 = vmatmul.mubr.f32.gmra.mrb[0].mxu0 %v179
    %v322 = vpop.f32.mrb[0].mxu0
    %v323 = vadd.f32 %v126, %v322
    %v324 = vpop.f32.mrb[0].mxu0
    %325 = vmatprep.mubr.f32.mxu0 0.0
    %326 = vmatmul.mubr.f32.gmra.mrb[0].mxu0 %v182
    %v327 = vpop.f32.mrb[0].mxu0
    %v328 = vadd.f32 %v131, %v327
    %v329 = vpop.f32.mrb[0].mxu0
    %330 = vmatprep.mubr.f32.mxu0 0.0
    %331 = vmatmul.mubr.f32.gmra.mrb[0].mxu0 %v185
    %v332 = vpop.f32.mrb[0].mxu0
    %v333 = vadd.f32 %v136, %v332
    %v334 = vpop.f32.mrb[0].mxu0
    %335 = vdwg.mxu0
    %v336 = vmax.f32 %v258, 0.0
    %v337 = vmax.f32 %v263, 0.0
    %v338 = vmax.f32 %v268, 0.0
    %v339 = vmax.f32 %v273, 0.0
    %v340 = vmax.f32 %v278, 0.0
    %v341 = vmax.f32 %v283, 0.0
    %v342 = vmax.f32 %v288, 0.0
    %v343 = vmax.f32 %v293, 0.0
    %v344 = vmax.f32 %v298, 0.0
    %v345 = vmax.f32 %v303, 0.0
    %v346 = vmax.f32 %v308, 0.0
    %v347 = vmax.f32 %v313, 0.0
    %v348 = vmax.f32 %v318, 0.0
    %v349 = vmax.f32 %v323, 0.0
    %v350 = vmax.f32 %v328, 0.0
    %v351 = vmax.f32 %v333, 0.0
    %353 = vset.pattern.permute.xlu0 0
    %354 = vperm.xlu0 %353, %v56
    %v355 = vpop.permute.xlu0 %354
    %v357 = vlaneseq
    %v358 = vshrl.u32 %v357, 7
    %v359 = vsub.s32 0, %v358
    %v360 = vrot.slane %v355, %v359
    %361 = vmatprep.subr.mxu0 0.0
    %362 = vmatpush1.msra.mxu0 %v336
    %363 = vmatprep.subr.mxu0 0.0
    %364 = vmatpush1.msra.mxu0 %v337
    %365 = vmatprep.subr.mxu0 0.0
    %366 = vmatpush1.msra.mxu0 %v338
    %367 = vmatprep.subr.mxu0 0.0
    %368 = vmatpush1.msra.mxu0 %v339
    %369 = vmatprep.subr.mxu0 0.0
    %370 = vmatpush1.msra.mxu0 %v340
    %371 = vmatprep.subr.mxu0 0.0
    %372 = vmatpush1.msra.mxu0 %v341
    %373 = vmatprep.subr.mxu0 0.0
    %374 = vmatpush1.msra.mxu0 %v342
    %375 = vmatprep.subr.mxu0 0.0
    %376 = vmatpush1.msra.mxu0 %v343
    %377 = vmatprep.subr.mxu0 0.0
    %378 = vmatpush1.msra.mxu0 %v344
    %379 = vmatprep.subr.mxu0 0.0
    %380 = vmatpush1.msra.mxu0 %v345
    %381 = vmatprep.subr.mxu0 0.0
    %382 = vmatpush1.msra.mxu0 %v346
    %383 = vmatprep.subr.mxu0 0.0
    %384 = vmatpush1.msra.mxu0 %v347
    %385 = vmatprep.subr.mxu0 0.0
    %386 = vmatpush1.msra.mxu0 %v348
    %387 = vmatprep.subr.mxu0 0.0
    %388 = vmatpush1.msra.mxu0 %v349
    %389 = vmatprep.subr.mxu0 0.0
    %390 = vmatpush1.msra.mxu0 %v350
    %391 = vmatprep.subr.mxu0 0.0
    %392 = vmatpush1.msra.mxu0 %v351
    %393 = vmatprep.subr.mxu0 0.0
    %394 = vmatpush1.msra.mxu0 0.0
    %395 = vmatprep.subr.mxu0 0.0
    %396 = vmatpush1.msra.mxu0 0.0
    %397 = vmatprep.subr.mxu0 0.0
    %398 = vmatpush1.msra.mxu0 0.0
    %399 = vmatprep.subr.mxu0 0.0
    %400 = vmatpush1.msra.mxu0 0.0
    %401 = vmatprep.subr.mxu0 0.0
    %402 = vmatpush1.msra.mxu0 0.0
    %403 = vmatprep.subr.mxu0 0.0
    %404 = vmatpush1.msra.mxu0 0.0
    %405 = vmatprep.subr.mxu0 0.0
    %406 = vmatpush1.msra.mxu0 0.0
    %407 = vmatprep.subr.mxu0 0.0
    %408 = vmatpush1.msra.mxu0 0.0
    %409 = vmatprep.subr.mxu0 0.0
    %410 = vmatpush1.msra.mxu0 0.0
    %411 = vmatprep.subr.mxu0 0.0
    %412 = vmatpush1.msra.mxu0 0.0
    %413 = vmatprep.subr.mxu0 0.0
    %414 = vmatpush1.msra.mxu0 0.0
    %415 = vmatprep.subr.mxu0 0.0
    %416 = vmatpush1.msra.mxu0 0.0
    %417 = vmatprep.subr.mxu0 0.0
    %418 = vmatpush1.msra.mxu0 0.0
    %419 = vmatprep.subr.mxu0 0.0
    %420 = vmatpush1.msra.mxu0 0.0
    %421 = vmatprep.subr.mxu0 0.0
    %422 = vmatpush1.msra.mxu0 0.0
    %423 = vmatprep.subr.mxu0 0.0
    %424 = vmatpush1.msra.mxu0 0.0
    %425 = vmatprep.mubr.f32.mxu0 0.0
    %426 = vmatmul.mubr.f32.gmra.mrb[0].mxu0 %v55
    %v427 = vpop.f32.mrb[0].mxu0
    %v428 = vadd.f32 %v360, %v427
    %v429 = vpop.f32.mrb[0].mxu0
    %430 = vdwg.mxu0
    %v431 = vmul.f32 %v428, 1.442695
    %v432 = vpow.pop %v431
    %v433 = vadd.f32 %v432, 1.0
    %v434 = vrcp.pop %v433
    %v435 = vmul.f32 1.0, %v434
    %v436 = vsub.f32 1.0, %v435
    %v438 = vrot.slane %v435, 7
    %vm440 = vcmask 1040384
    %v441 = vsel %vm440, %v436, %v438
    %442 = vst [vmem:[#allocation3] sm:$0x3] %v441
    // Predicated region
    $region22: #{tpu_custom_call.1} parent=1 // pred_check
      _
    $region23: #{tpu_custom_call.1} parent=1 // pred_check_branch
      %444 = sbr.rel (0) target = $region25
    $region24: #{tpu_custom_call.1} parent=1 // pred_region
      %s446 = ssub.s32 32, 32
      %447 = vsyncadd [#allocation4], %s446
      %s449 = sshll.u32 [#allocation3], 4
      %s450 = int_to_ptr.vmem [resolvable:$true] %s449
      %452 = dma.vmem_to_hbm [thread:$0]  %s450, 32, %s5, [#allocation4]
    $region25: #{tpu_custom_call.1} parent=1 // pred_fallthru
      _
    // Predicated region
    $region26: #{tpu_custom_call.1} parent=1 // pred_check
      _
    $region27: #{tpu_custom_call.1} parent=1 // pred_check_branch
      %454 = sbr.rel (0) target = $region29
    $region28: #{tpu_custom_call.1} parent=1 // pred_region
      %455 = dma.done [#allocation4], 32
    $region29: #{tpu_custom_call.1} parent=1 // pred_fallthru
      _
    %456 = vsyncpa [#allocation4], 1

</llo_original>
